<compile_context>
chip_gen: v6e
topology: v6e:2x2x1
jax: 0.10.0
libtpu: 0.0.40
codegen_flags: <defaults>
</compile_context>

<pallas_src>
import functools

import jax
import jax.numpy as jnp
from jax.experimental import pallas as pl
from jax.experimental.pallas import tpu as pltpu


def _round_up(x, m):
    return (x + m - 1) // m * m


# ----------------------------------------------------------------------------
# Shared in-kernel math: GRUCell + additive attention.
# Matmuls run with bf16 operands / f32 accumulation; elementwise math is f32.
# ----------------------------------------------------------------------------
def _gru_attention(x, h, enc, enc_proj, mask,
                   wi, wh, bi, bh, whid, bhid, watt, batt, H, Hp):
    xb = x.astype(jnp.bfloat16)
    hb = h.astype(jnp.bfloat16)

    # Fused gate matmuls; gate g lives in lane-aligned columns [g*Hp, g*Hp+H).
    gi = jnp.dot(xb, wi, preferred_element_type=jnp.float32) + bi   # (B, 3Hp)
    gh = jnp.dot(hb, wh, preferred_element_type=jnp.float32) + bh   # (B, 3Hp)
    r = jax.nn.sigmoid(gi[:, 0:H] + gh[:, 0:H])
    z = jax.nn.sigmoid(gi[:, Hp:Hp + H] + gh[:, Hp:Hp + H])
    n = jnp.tanh(gi[:, 2 * Hp:2 * Hp + H] + r * gh[:, 2 * Hp:2 * Hp + H])
    h_new = (1.0 - z) * n + z * h                                   # f32 (B, H)

    # Additive attention (encoder projection pre-computed, step-invariant).
    hid_proj = (jnp.dot(h_new.astype(jnp.bfloat16), whid,
                        preferred_element_type=jnp.float32) + bhid)  # (B, A)
    comb = jnp.tanh(enc_proj + hid_proj[:, None, :])                 # (B, L, A)

    # N=1 "matmul" as VPU multiply + lane reduction (MXU stays free).
    scores = jnp.sum(comb * watt, axis=-1) + batt                    # (B, L)
    scores = jnp.where(mask > 0.5, jnp.float32(-1e30), scores)
    scores = scores - jnp.max(scores, axis=1, keepdims=True)
    exp_s = jnp.exp(scores)
    denom = jnp.sum(exp_s, axis=1, keepdims=True)
    alpha = exp_s * pl.reciprocal(denom, approx=True)                # EUP slot

    context = jnp.sum(alpha[:, :, None] * enc, axis=1)               # (B, A)
    return h_new, context


def _vocab_logits(h_new, context, wvh, wvc, bvoc):
    # [h_new, context] @ W_voc done as two dots -> no lane concat / relayout.
    return (jnp.dot(h_new.astype(jnp.bfloat16), wvh,
                    preferred_element_type=jnp.float32)
            + jnp.dot(context.astype(jnp.bfloat16), wvc,
                      preferred_element_type=jnp.float32)
            + bvoc)


# ----------------------------------------------------------------------------
# Kernel 1: fused single-step forward.  Grid tiles the vocab axis only; the
# cheap GRU + attention is recomputed per tile (free filler under the wvoc
# stream) so the axis stays "parallel" (pays on v7x's two TensorCores).
# ----------------------------------------------------------------------------
def decoder_step_kernel(x_ref, h_ref, enc_ref, encp_ref, mask_ref,
                        wi_ref, wh_ref, bi_ref, bh_ref,
                        whid_ref, bhid_ref, watt_ref, batt_ref,
                        wvh_ref, wvc_ref, bvoc_ref,
                        word_ref, hnew_ref):
    H = h_ref.shape[1]
    Hp = bi_ref.shape[1] // 3
    h_new, context = _gru_attention(
        x_ref[...], h_ref[...], enc_ref[...], encp_ref[...], mask_ref[...],
        wi_ref[...], wh_ref[...], bi_ref[...], bh_ref[...],
        whid_ref[...], bhid_ref[...], watt_ref[...], batt_ref[0, 0], H, Hp)
    hnew_ref[...] = h_new.astype(hnew_ref.dtype)
    word_ref[...] = _vocab_logits(
        h_new, context, wvh_ref[...], wvc_ref[...], bvoc_ref[...]
    ).astype(word_ref.dtype)


# ----------------------------------------------------------------------------
# Kernel 2: weight-resident multi-step (teacher-forced) decode.  Grid iterates
# decode steps; all weights use constant index maps so they are DMA'd into
# VMEM once and stay resident; the hidden state is carried in VMEM scratch.
# ----------------------------------------------------------------------------
def decode_loop_kernel(x_ref, h0_ref, enc_ref, encp_ref, mask_ref,
                       wi_ref, wh_ref, bi_ref, bh_ref,
                       whid_ref, bhid_ref, watt_ref, batt_ref,
                       wvh_ref, wvc_ref, bvoc_ref,
                       word_ref, hseq_ref, h_vmem):
    H = h0_ref.shape[1]
    Hp = bi_ref.shape[1] // 3

    @pl.when(pl.program_id(0) == 0)
    def _():
        h_vmem[...] = h0_ref[...]

    h = h_vmem[...]
    h_new, context = _gru_attention(
        x_ref[0], h, enc_ref[...], encp_ref[...], mask_ref[...],
        wi_ref[...], wh_ref[...], bi_ref[...], bh_ref[...],
        whid_ref[...], bhid_ref[...], watt_ref[...], batt_ref[0, 0], H, Hp)
    h_vmem[...] = h_new                              # f32 recurrence carry
    hseq_ref[0] = h_new.astype(hseq_ref.dtype)
    word_ref[0] = _vocab_logits(
        h_new, context, wvh_ref[...], wvc_ref[...], bvoc_ref[...]
    ).astype(word_ref.dtype)


# ----------------------------------------------------------------------------
# Wrappers
# ----------------------------------------------------------------------------
def precompute_attention_keys(enc_output, params):
    """Step-invariant encoder projection; compute once, reuse every step."""
    return enc_output @ params["wenc"] + params["benc"]


def decoder_gru_step(dec_input, dec_hidden, enc_output, enc_proj, masks,
                     params, *, tile_v=4096):
    B, E = dec_input.shape
    H = dec_hidden.shape[1]
    L, A = enc_output.shape[1], enc_output.shape[2]
    Hp = params["bi"].shape[1] // 3
    V = params["wvoc_h"].shape[1]

    tv = V if V <= tile_v else tile_v
    assert V % tv == 0, "vocab size must be a multiple of the vocab tile"
    assert tv == V or tv % 128 == 0, "vocab tile must be lane-aligned (128)"

    const2 = lambda j: (0, 0)
    const3 = lambda j: (0, 0, 0)

    # Scoped-VMEM budget: double-buffered bf16 vocab-weight tiles + f32 logits
    # tile + the small resident activations/weights.  Capped at 64 MiB so the
    # same setting is safe on v7x (64 MiB physical VMEM, half of v5e/v6e).
    tile_bytes = 2 * ((H + A) * tv * 2 + tv * 4 + B * tv * 4)
    vmem_limit = int(min(64 * 2**20, max(32 * 2**20, 4 * tile_bytes)))

    # TODO(synk): if the wvoc DMA is still exposed after maxing tv, sweep
    # pipeline_mode=pl.Buffered(3) on the two wvoc BlockSpecs.
    word_pred, h_new = pl.pallas_call(
        decoder_step_kernel,
        out_shape=(
            jax.ShapeDtypeStruct((B, V), jnp.float32),
            jax.ShapeDtypeStruct((B, H), jnp.float32),
        ),
        grid=(V // tv,),
        in_specs=[
            pl.BlockSpec((B, E), const2),
            pl.BlockSpec((B, H), const2),
            pl.BlockSpec((B, L, A), const3),
            pl.BlockSpec((B, L, A), const3),
            pl.BlockSpec((B, L), const2),
            pl.BlockSpec((E, 3 * Hp), const2),
            pl.BlockSpec((H, 3 * Hp), const2),
            pl.BlockSpec((1, 3 * Hp), const2),
            pl.BlockSpec((1, 3 * Hp), const2),
            pl.BlockSpec((H, A), const2),
            pl.BlockSpec((1, A), const2),
            pl.BlockSpec((1, A), const2),
            pl.BlockSpec(memory_space=pltpu.MemorySpace.SMEM),   # scalar batt
            pl.BlockSpec((H, tv), lambda j: (0, j)),             # wvoc (h half)
            pl.BlockSpec((A, tv), lambda j: (0, j)),             # wvoc (ctx half)
            pl.BlockSpec((1, tv), lambda j: (0, j)),             # bvoc
        ],
        out_specs=(
            pl.BlockSpec((B, tv), lambda j: (0, j)),
            pl.BlockSpec((B, H), const2),
        ),
        compiler_params=pltpu.CompilerParams(
            dimension_semantics=("parallel",),
            vmem_limit_bytes=vmem_limit,
        ),
    )(
        dec_input, dec_hidden, enc_output, enc_proj, masks,
        params["wi"], params["wh"], params["bi"], params["bh"],
        params["whid"], params["bhid"], params["watt"], params["batt"],
        params["wvoc_h"], params["wvoc_c"], params["bvoc"],
    )
    return word_pred, h_new


def decoder_gru_forward(dec_input, dec_hidden, enc_output, masks, params,
                        *, tile_v=4096):
    """Single-step forward matching DecoderGru.forward."""
    enc_proj = precompute_attention_keys(enc_output, params)
    return decoder_gru_step(dec_input, dec_hidden, enc_output, enc_proj, masks,
                            params, tile_v=tile_v)


def decoder_gru_decode(dec_inputs, dec_hidden, enc_output, masks, params):
    """Weight-resident multi-step (teacher-forced) decode.

    dec_inputs: (T, B, E).  Returns (logits (T, B, V), hiddens (T, B, H)).
    Per-step HBM traffic is only x_t in and logits/h_t out; all weights
    (including the full vocab projection) stay resident in VMEM.
    """
    T, B, E = dec_inputs.shape
    H = dec_hidden.shape[1]
    L, A = enc_output.shape[1], enc_output.shape[2]
    Hp = params["bi"].shape[1] // 3
    V = params["wvoc_h"].shape[1]
    enc_proj = precompute_attention_keys(enc_output, params)

    const2 = lambda t: (0, 0)
    const3 = lambda t: (0, 0, 0)

    resident_bytes = ((H + A) * V * 2 + (E + H) * 3 * Hp * 2
                      + B * (2 * L * A + E + H) * 4 + 2 * B * (V + H) * 4)
    vmem_limit = int(min(64 * 2**20, max(32 * 2**20, 2 * resident_bytes)))
    # TODO(synk): for production V where the full bf16 wvoc does not fit VMEM
    # (esp. v7x's 64 MiB), add an inner "arbitrary" vocab-tile grid axis and
    # stream wvoc tiles while keeping the GRU/attention weights resident.

    words, hiddens = pl.pallas_call(
        decode_loop_kernel,
        out_shape=(
            jax.ShapeDtypeStruct((T, B, V), jnp.float32),
            jax.ShapeDtypeStruct((T, B, H), jnp.float32),
        ),
        grid=(T,),
        in_specs=[
            pl.BlockSpec((1, B, E), lambda t: (t, 0, 0)),
            pl.BlockSpec((B, H), const2),
            pl.BlockSpec((B, L, A), const3),
            pl.BlockSpec((B, L, A), const3),
            pl.BlockSpec((B, L), const2),
            pl.BlockSpec((E, 3 * Hp), const2),
            pl.BlockSpec((H, 3 * Hp), const2),
            pl.BlockSpec((1, 3 * Hp), const2),
            pl.BlockSpec((1, 3 * Hp), const2),
            pl.BlockSpec((H, A), const2),
            pl.BlockSpec((1, A), const2),
            pl.BlockSpec((1, A), const2),
            pl.BlockSpec(memory_space=pltpu.MemorySpace.SMEM),
            pl.BlockSpec((H, V), const2),
            pl.BlockSpec((A, V), const2),
            pl.BlockSpec((1, V), const2),
        ],
        out_specs=(
            pl.BlockSpec((1, B, V), lambda t: (t, 0, 0)),
            pl.BlockSpec((1, B, H), lambda t: (t, 0, 0)),
        ),
        scratch_shapes=[pltpu.VMEM((B, H), jnp.float32)],
        compiler_params=pltpu.CompilerParams(
            dimension_semantics=("arbitrary",),      # sequential recurrence
            vmem_limit_bytes=vmem_limit,
        ),
    )(
        dec_inputs, dec_hidden, enc_output, enc_proj, masks,
        params["wi"], params["wh"], params["bi"], params["bh"],
        params["whid"], params["bhid"], params["watt"], params["batt"],
        params["wvoc_h"], params["wvoc_c"], params["bvoc"],
    )
    return words, hiddens


# ----------------------------------------------------------------------------
# Pure-JAX reference (same math, same bf16 quantization of matmul operands)
# ----------------------------------------------------------------------------
def reference_step(x, h, enc, enc_proj, masks, p):
    H = h.shape[1]
    Hp = p["bi"].shape[1] // 3
    gi = jnp.dot(x.astype(jnp.bfloat16), p["wi"],
                 preferred_element_type=jnp.float32) + p["bi"]
    gh = jnp.dot(h.astype(jnp.bfloat16), p["wh"],
                 preferred_element_type=jnp.float32) + p["bh"]
    r = jax.nn.sigmoid(gi[:, 0:H] + gh[:, 0:H])
    z = jax.nn.sigmoid(gi[:, Hp:Hp + H] + gh[:, Hp:Hp + H])
    n = jnp.tanh(gi[:, 2 * Hp:2 * Hp + H] + r * gh[:, 2 * Hp:2 * Hp + H])
    h_new = (1.0 - z) * n + z * h

    hid_proj = jnp.dot(h_new.astype(jnp.bfloat16), p["whid"],
                       preferred_element_type=jnp.float32) + p["bhid"]
    comb = jnp.tanh(enc_proj + hid_proj[:, None, :])
    scores = jnp.sum(comb * p["watt"], axis=-1) + p["batt"][0, 0]
    scores = jnp.where(masks > 0.5, -1e30, scores)
    alpha = jax.nn.softmax(scores, axis=1)
    context = jnp.sum(alpha[:, :, None] * enc, axis=1)

    word = (jnp.dot(h_new.astype(jnp.bfloat16), p["wvoc_h"],
                    preferred_element_type=jnp.float32)
            + jnp.dot(context.astype(jnp.bfloat16), p["wvoc_c"],
                      preferred_element_type=jnp.float32)
            + p["bvoc"])
    return word, h_new


def decoder_gru_reference(dec_input, dec_hidden, enc_output, masks, params):
    enc_proj = precompute_attention_keys(enc_output, params)
    return reference_step(dec_input, dec_hidden, enc_output, enc_proj, masks,
                          params)


# ----------------------------------------------------------------------------
# Deterministic parameter init (shapes implied by the module __init__)
# ----------------------------------------------------------------------------
def make_params(key, vocab_size, embedding_dim, hidden_dim, attention_dim):
    E, H, A, V = embedding_dim, hidden_dim, attention_dim, vocab_size
    Hp = _round_up(H, 128)          # lane-aligned gate boundaries
    ks = iter(jax.random.split(key, 24))

    def u(shape, scale):
        return jax.random.uniform(next(ks), shape, jnp.float32, -scale, scale)

    s = 1.0 / (H ** 0.5)            # PyTorch GRUCell default init scale

    def pack_gate_matrix(rows, scale):
        w = jnp.zeros((rows, 3 * Hp), jnp.float32)
        for g in range(3):          # gate order r | z | n, each at g*Hp
            w = w.at[:, g * Hp:g * Hp + H].set(u((rows, H), scale))
        return w

    def pack_gate_bias(scale):
        b = jnp.zeros((1, 3 * Hp), jnp.float32)
        for g in range(3):
            b = b.at[:, g * Hp:g * Hp + H].set(u((1, H), scale))
        return b

    p = {
        # GRUCell packed, pre-transposed, Hp-padded (gate g at cols [g*Hp, g*Hp+H))
        "wi": pack_gate_matrix(E, s).astype(jnp.bfloat16),
        "wh": pack_gate_matrix(H, s).astype(jnp.bfloat16),
        "bi": pack_gate_bias(s),
        "bh": pack_gate_bias(s),
        # Attention
        "wenc": u((A, A), 0.1), "benc": jnp.zeros((1, A), jnp.float32),
        "whid": u((H, A), 0.1).astype(jnp.bfloat16),
        "bhid": jnp.zeros((1, A), jnp.float32),
        "watt": u((1, A), 0.1), "batt": jnp.zeros((1, 1), jnp.float32),
        # lin2voc: uniform(-0.1, 0.1), bias zero (init_weights); stored as two
        # bf16 halves (hidden-rows, context-rows) so no concat is ever needed.
        "wvoc_h": u((H, V), 0.1).astype(jnp.bfloat16),
        "wvoc_c": u((A, V), 0.1).astype(jnp.bfloat16),
        "bvoc": jnp.zeros((1, V), jnp.float32),
    }
    return p


if __name__ == "__main__":
    # Small shapes consistent with the module.  NOTE: B=4 fills half the
    # sublanes of every vreg; stack more beams/sequences per call when the
    # surrounding decode loop allows it (weight traffic is B-independent).
    B, L, T = 4, 8, 6
    vocab_size, embedding_dim, hidden_dim, attention_dim = 128, 32, 32, 32

    key = jax.random.PRNGKey(0)
    k_in, k_hid, k_enc, k_seq, k_par = jax.random.split(key, 5)

    dec_input = jax.random.normal(k_in, (B, embedding_dim), jnp.float32)
    dec_hidden = jax.random.normal(k_hid, (B, hidden_dim), jnp.float32)
    enc_output = jax.random.normal(k_enc, (B, L, attention_dim), jnp.float32)
    # mask out the tail of each sequence (1.0 == masked); >=1 valid position
    lengths = jnp.array([8, 5, 3, 7], dtype=jnp.int32)
    masks = (jnp.arange(L)[None, :] >= lengths[:, None]).astype(jnp.float32)

    params = make_params(k_par, vocab_size, embedding_dim, hidden_dim,
                         attention_dim)

    # ---- single-step forward (matches DecoderGru.forward) ------------------
    word_pred, new_hidden = decoder_gru_forward(
        dec_input, dec_hidden, enc_output, masks, params)
    jax.block_until_ready((word_pred, new_hidden))

    word_ref, hid_ref = decoder_gru_reference(
        dec_input, dec_hidden, enc_output, masks, params)
    assert word_pred.shape == (B, vocab_size)
    assert new_hidden.shape == (B, hidden_dim)
    assert jnp.allclose(new_hidden, hid_ref, atol=2e-3, rtol=2e-3)
    assert jnp.allclose(word_pred, word_ref, atol=1e-2, rtol=1e-2)

    # ---- weight-resident multi-step decode (teacher forced) ----------------
    dec_inputs = jax.random.normal(k_seq, (T, B, embedding_dim), jnp.float32)
    words_seq, hidden_seq = decoder_gru_decode(
        dec_inputs, dec_hidden, enc_output, masks, params)
    jax.block_until_ready((words_seq, hidden_seq))

    enc_proj = precompute_attention_keys(enc_output, params)
    h = dec_hidden
    ref_words, ref_hiddens = [], []
    for t in range(T):
        w, h = reference_step(dec_inputs[t], h, enc_output, enc_proj, masks,
                              params)
        ref_words.append(w)
        ref_hiddens.append(h)
    ref_words = jnp.stack(ref_words)
    ref_hiddens = jnp.stack(ref_hiddens)

    assert words_seq.shape == (T, B, vocab_size)
    assert hidden_seq.shape == (T, B, hidden_dim)
    assert jnp.allclose(hidden_seq, ref_hiddens, atol=5e-3, rtol=5e-3)
    assert jnp.allclose(words_seq, ref_words, atol=2e-2, rtol=2e-2)

    print("KERNEL_OK")
</pallas_src>

<mosaic_0001>
module attributes {stable_mosaic.version = 11 : i64} {
  func.func @decoder_step_kernel(%arg0: i32, %arg1: memref<4x32xf32, #tpu.memory_space<vmem>>, %arg2: memref<4x32xf32, #tpu.memory_space<vmem>>, %arg3: memref<4x8x32xf32, #tpu.memory_space<vmem>>, %arg4: memref<4x8x32xf32, #tpu.memory_space<vmem>>, %arg5: memref<4x8xf32, #tpu.memory_space<vmem>>, %arg6: memref<32x384xbf16, #tpu.memory_space<vmem>>, %arg7: memref<32x384xbf16, #tpu.memory_space<vmem>>, %arg8: memref<1x384xf32, #tpu.memory_space<vmem>>, %arg9: memref<1x384xf32, #tpu.memory_space<vmem>>, %arg10: memref<32x32xbf16, #tpu.memory_space<vmem>>, %arg11: memref<1x32xf32, #tpu.memory_space<vmem>>, %arg12: memref<1x32xf32, #tpu.memory_space<vmem>>, %arg13: memref<1x1xf32, #tpu.memory_space<smem>>, %arg14: memref<32x128xbf16, #tpu.memory_space<vmem>>, %arg15: memref<32x128xbf16, #tpu.memory_space<vmem>>, %arg16: memref<1x128xf32, #tpu.memory_space<vmem>>, %arg17: memref<4x128xf32, #tpu.memory_space<vmem>>, %arg18: memref<4x32xf32, #tpu.memory_space<vmem>>) attributes {dimension_semantics = [#tpu.dimension_semantics<parallel>], iteration_bounds = array<i64: 1>, scalar_prefetch = 0 : i64, scratch_operands = 0 : i64, tpu.core_type = #tpu.core_type<tc>, window_params = [{pipeline_mode = #tpu.pipeline_mode<synchronous>, transform_indices = @transform_0, window_bounds = array<i64: 4, 32>}, {pipeline_mode = #tpu.pipeline_mode<synchronous>, transform_indices = @transform_1, window_bounds = array<i64: 4, 32>}, {pipeline_mode = #tpu.pipeline_mode<synchronous>, transform_indices = @transform_2, window_bounds = array<i64: 4, 8, 32>}, {pipeline_mode = #tpu.pipeline_mode<synchronous>, transform_indices = @transform_3, window_bounds = array<i64: 4, 8, 32>}, {pipeline_mode = #tpu.pipeline_mode<synchronous>, transform_indices = @transform_4, window_bounds = array<i64: 4, 8>}, {pipeline_mode = #tpu.pipeline_mode<synchronous>, transform_indices = @transform_5, window_bounds = array<i64: 32, 384>}, {pipeline_mode = #tpu.pipeline_mode<synchronous>, transform_indices = @transform_6, window_bounds = array<i64: 32, 384>}, {pipeline_mode = #tpu.pipeline_mode<synchronous>, transform_indices = @transform_7, window_bounds = array<i64: 1, 384>}, {pipeline_mode = #tpu.pipeline_mode<synchronous>, transform_indices = @transform_8, window_bounds = array<i64: 1, 384>}, {pipeline_mode = #tpu.pipeline_mode<synchronous>, transform_indices = @transform_9, window_bounds = array<i64: 32, 32>}, {pipeline_mode = #tpu.pipeline_mode<synchronous>, transform_indices = @transform_10, window_bounds = array<i64: 1, 32>}, {pipeline_mode = #tpu.pipeline_mode<synchronous>, transform_indices = @transform_11, window_bounds = array<i64: 1, 32>}, {transform_indices = @transform_12, window_bounds = array<i64: 1, 1>}, {transform_indices = @transform_13, window_bounds = array<i64: 32, 128>}, {transform_indices = @transform_14, window_bounds = array<i64: 32, 128>}, {transform_indices = @transform_15, window_bounds = array<i64: 1, 128>}, {transform_indices = @transform_16, window_bounds = array<i64: 4, 128>}, {pipeline_mode = #tpu.pipeline_mode<synchronous>, transform_indices = @transform_17, window_bounds = array<i64: 4, 32>}]} {
    %c0 = arith.constant 0 : index
    %c0_0 = arith.constant 0 : index
    %0 = vector.load %arg1[%c0, %c0_0] : memref<4x32xf32, #tpu.memory_space<vmem>>, vector<4x32xf32>
    %c0_1 = arith.constant 0 : index
    %c0_2 = arith.constant 0 : index
    %1 = vector.load %arg2[%c0_1, %c0_2] : memref<4x32xf32, #tpu.memory_space<vmem>>, vector<4x32xf32>
    %c0_3 = arith.constant 0 : index
    %c0_4 = arith.constant 0 : index
    %c0_5 = arith.constant 0 : index
    %2 = vector.load %arg3[%c0_3, %c0_4, %c0_5] : memref<4x8x32xf32, #tpu.memory_space<vmem>>, vector<4x8x32xf32>
    %c0_6 = arith.constant 0 : index
    %c0_7 = arith.constant 0 : index
    %c0_8 = arith.constant 0 : index
    %3 = vector.load %arg4[%c0_6, %c0_7, %c0_8] : memref<4x8x32xf32, #tpu.memory_space<vmem>>, vector<4x8x32xf32>
    %c0_9 = arith.constant 0 : index
    %c0_10 = arith.constant 0 : index
    %4 = vector.load %arg5[%c0_9, %c0_10] : memref<4x8xf32, #tpu.memory_space<vmem>>, vector<4x8xf32>
    %c0_11 = arith.constant 0 : index
    %c0_12 = arith.constant 0 : index
    %5 = vector.load %arg6[%c0_11, %c0_12] : memref<32x384xbf16, #tpu.memory_space<vmem>>, vector<32x384xbf16>
    %c0_13 = arith.constant 0 : index
    %c0_14 = arith.constant 0 : index
    %6 = vector.load %arg7[%c0_13, %c0_14] : memref<32x384xbf16, #tpu.memory_space<vmem>>, vector<32x384xbf16>
    %c0_15 = arith.constant 0 : index
    %c0_16 = arith.constant 0 : index
    %7 = vector.load %arg8[%c0_15, %c0_16] : memref<1x384xf32, #tpu.memory_space<vmem>>, vector<1x384xf32>
    %c0_17 = arith.constant 0 : index
    %c0_18 = arith.constant 0 : index
    %8 = vector.load %arg9[%c0_17, %c0_18] : memref<1x384xf32, #tpu.memory_space<vmem>>, vector<1x384xf32>
    %c0_19 = arith.constant 0 : index
    %c0_20 = arith.constant 0 : index
    %9 = vector.load %arg10[%c0_19, %c0_20] : memref<32x32xbf16, #tpu.memory_space<vmem>>, vector<32x32xbf16>
    %c0_21 = arith.constant 0 : index
    %c0_22 = arith.constant 0 : index
    %10 = vector.load %arg11[%c0_21, %c0_22] : memref<1x32xf32, #tpu.memory_space<vmem>>, vector<1x32xf32>
    %c0_23 = arith.constant 0 : index
    %c0_24 = arith.constant 0 : index
    %11 = vector.load %arg12[%c0_23, %c0_24] : memref<1x32xf32, #tpu.memory_space<vmem>>, vector<1x32xf32>
    %c0_25 = arith.constant 0 : index
    %c0_26 = arith.constant 0 : index
    %12 = memref.load %arg13[%c0_25, %c0_26] : memref<1x1xf32, #tpu.memory_space<smem>>
    %13 = arith.truncf %0 : vector<4x32xf32> to vector<4x32xbf16>
    %14 = arith.truncf %1 : vector<4x32xf32> to vector<4x32xbf16>
    %cst = arith.constant dense<0.000000e+00> : vector<4x384xf32>
    %15 = tpu.matmul %13, %5, %cst {dimension_numbers = #tpu.dot_dimension_numbers<[1], [0], [0], [1], [0, 0, 1, 1], [], []>} : vector<4x32xbf16>, vector<32x384xbf16>, vector<4x384xf32> -> vector<4x384xf32>
    %16 = vector.broadcast %7 : vector<1x384xf32> to vector<4x384xf32>
    %17 = arith.addf %15, %16 : vector<4x384xf32>
    %cst_27 = arith.constant dense<0.000000e+00> : vector<4x384xf32>
    %18 = tpu.matmul %14, %6, %cst_27 {dimension_numbers = #tpu.dot_dimension_numbers<[1], [0], [0], [1], [0, 0, 1, 1], [], []>} : vector<4x32xbf16>, vector<32x384xbf16>, vector<4x384xf32> -> vector<4x384xf32>
    %19 = vector.broadcast %8 : vector<1x384xf32> to vector<4x384xf32>
    %20 = arith.addf %18, %19 : vector<4x384xf32>
    %21 = vector.extract_strided_slice %17 {offsets = [0, 0], sizes = [4, 32], strides = [1, 1]} : vector<4x384xf32> to vector<4x32xf32>
    %22 = vector.extract_strided_slice %20 {offsets = [0, 0], sizes = [4, 32], strides = [1, 1]} : vector<4x384xf32> to vector<4x32xf32>
    %23 = arith.addf %21, %22 : vector<4x32xf32>
    %24 = arith.negf %23 : vector<4x32xf32>
    %25 = math.exp %24 : vector<4x32xf32>
    %cst_28 = arith.constant 1.000000e+00 : f32
    %26 = vector.broadcast %cst_28 : f32 to vector<4x32xf32>
    %27 = arith.addf %26, %25 : vector<4x32xf32>
    %28 = arith.divf %26, %27 : vector<4x32xf32>
    %29 = vector.extract_strided_slice %17 {offsets = [0, 128], sizes = [4, 32], strides = [1, 1]} : vector<4x384xf32> to vector<4x32xf32>
    %30 = vector.extract_strided_slice %20 {offsets = [0, 128], sizes = [4, 32], strides = [1, 1]} : vector<4x384xf32> to vector<4x32xf32>
    %31 = arith.addf %29, %30 : vector<4x32xf32>
    %32 = arith.negf %31 : vector<4x32xf32>
    %33 = math.exp %32 : vector<4x32xf32>
    %cst_29 = arith.constant 1.000000e+00 : f32
    %34 = vector.broadcast %cst_29 : f32 to vector<4x32xf32>
    %35 = arith.addf %34, %33 : vector<4x32xf32>
    %36 = arith.divf %34, %35 : vector<4x32xf32>
    %37 = vector.extract_strided_slice %17 {offsets = [0, 256], sizes = [4, 32], strides = [1, 1]} : vector<4x384xf32> to vector<4x32xf32>
    %38 = vector.extract_strided_slice %20 {offsets = [0, 256], sizes = [4, 32], strides = [1, 1]} : vector<4x384xf32> to vector<4x32xf32>
    %39 = arith.mulf %28, %38 : vector<4x32xf32>
    %40 = arith.addf %37, %39 : vector<4x32xf32>
    %41 = math.tanh %40 : vector<4x32xf32>
    %cst_30 = arith.constant 1.000000e+00 : f32
    %42 = vector.broadcast %cst_30 : f32 to vector<4x32xf32>
    %43 = arith.subf %42, %36 : vector<4x32xf32>
    %44 = arith.mulf %43, %41 : vector<4x32xf32>
    %45 = arith.mulf %36, %1 : vector<4x32xf32>
    %46 = arith.addf %44, %45 : vector<4x32xf32>
    %47 = arith.truncf %46 : vector<4x32xf32> to vector<4x32xbf16>
    %cst_31 = arith.constant dense<0.000000e+00> : vector<4x32xf32>
    %48 = tpu.matmul %47, %9, %cst_31 {dimension_numbers = #tpu.dot_dimension_numbers<[1], [0], [0], [1], [0, 0, 1, 1], [], []>} : vector<4x32xbf16>, vector<32x32xbf16>, vector<4x32xf32> -> vector<4x32xf32>
    %49 = vector.broadcast %10 : vector<1x32xf32> to vector<4x32xf32>
    %50 = arith.addf %48, %49 : vector<4x32xf32>
    %51 = vector.shape_cast %50 : vector<4x32xf32> to vector<4x1x32xf32>
    %52 = vector.broadcast %51 : vector<4x1x32xf32> to vector<4x8x32xf32>
    %53 = arith.addf %3, %52 : vector<4x8x32xf32>
    %54 = math.tanh %53 : vector<4x8x32xf32>
    %55 = vector.shape_cast %11 : vector<1x32xf32> to vector<1x1x32xf32>
    %56 = vector.broadcast %55 : vector<1x1x32xf32> to vector<4x8x32xf32>
    %57 = arith.mulf %54, %56 : vector<4x8x32xf32>
    %cst_32 = arith.constant dense<0.000000e+00> : vector<4x8xf32>
    %58 = vector.multi_reduction <add>, %57, %cst_32 [2] : vector<4x8x32xf32> to vector<4x8xf32>
    %59 = vector.broadcast %12 : f32 to vector<4x8xf32>
    %60 = arith.addf %58, %59 : vector<4x8xf32>
    %cst_33 = arith.constant 5.000000e-01 : f32
    %61 = vector.broadcast %cst_33 : f32 to vector<4x8xf32>
    %62 = arith.cmpf ogt, %4, %61 : vector<4x8xf32>
    %cst_34 = arith.constant -1.000000e+30 : f32
    %63 = vector.broadcast %cst_34 : f32 to vector<4x8xf32>
    %64 = arith.select %62, %63, %60 : vector<4x8xi1>, vector<4x8xf32>
    %cst_35 = arith.constant dense<0xFF800000> : vector<4xf32>
    %65 = vector.multi_reduction <maximumf>, %64, %cst_35 [1] : vector<4x8xf32> to vector<4xf32>
    %66 = vector.shape_cast %65 : vector<4xf32> to vector<4x1xf32>
    %67 = vector.broadcast %66 : vector<4x1xf32> to vector<4x8xf32>
    %68 = arith.subf %64, %67 : vector<4x8xf32>
    %69 = math.exp %68 : vector<4x8xf32>
    %cst_36 = arith.constant dense<0.000000e+00> : vector<4xf32>
    %70 = vector.multi_reduction <add>, %69, %cst_36 [1] : vector<4x8xf32> to vector<4xf32>
    %71 = vector.shape_cast %70 : vector<4xf32> to vector<4x1xf32>
    %72 = tpu.reciprocal %71 {approx = true} : vector<4x1xf32> -> vector<4x1xf32>
    %73 = vector.broadcast %72 : vector<4x1xf32> to vector<4x8xf32>
    %74 = arith.mulf %69, %73 : vector<4x8xf32>
    %75 = vector.shape_cast %74 : vector<4x8xf32> to vector<4x8x1xf32>
    %76 = vector.broadcast %75 : vector<4x8x1xf32> to vector<4x8x32xf32>
    %77 = arith.mulf %76, %2 : vector<4x8x32xf32>
    %cst_37 = arith.constant dense<0.000000e+00> : vector<4x32xf32>
    %78 = vector.multi_reduction <add>, %77, %cst_37 [1] : vector<4x8x32xf32> to vector<4x32xf32>
    %c0_38 = arith.constant 0 : index
    %c0_39 = arith.constant 0 : index
    %79 = vector.load %arg18[%c0_38, %c0_39] : memref<4x32xf32, #tpu.memory_space<vmem>>, vector<4x32xf32>
    tpu.vector_store %arg18[%c0_38, %c0_39], %46 {strides = array<i32>} : memref<4x32xf32, #tpu.memory_space<vmem>>, vector<4x32xf32>,
    %c0_40 = arith.constant 0 : index
    %c0_41 = arith.constant 0 : index
    %80 = vector.load %arg14[%c0_40, %c0_41] : memref<32x128xbf16, #tpu.memory_space<vmem>>, vector<32x128xbf16>
    %c0_42 = arith.constant 0 : index
    %c0_43 = arith.constant 0 : index
    %81 = vector.load %arg15[%c0_42, %c0_43] : memref<32x128xbf16, #tpu.memory_space<vmem>>, vector<32x128xbf16>
    %c0_44 = arith.constant 0 : index
    %c0_45 = arith.constant 0 : index
    %82 = vector.load %arg16[%c0_44, %c0_45] : memref<1x128xf32, #tpu.memory_space<vmem>>, vector<1x128xf32>
    %83 = arith.truncf %46 : vector<4x32xf32> to vector<4x32xbf16>
    %cst_46 = arith.constant dense<0.000000e+00> : vector<4x128xf32>
    %84 = tpu.matmul %83, %80, %cst_46 {dimension_numbers = #tpu.dot_dimension_numbers<[1], [0], [0], [1], [0, 0, 1, 1], [], []>} : vector<4x32xbf16>, vector<32x128xbf16>, vector<4x128xf32> -> vector<4x128xf32>
    %85 = arith.truncf %78 : vector<4x32xf32> to vector<4x32xbf16>
    %cst_47 = arith.constant dense<0.000000e+00> : vector<4x128xf32>
    %86 = tpu.matmul %85, %81, %cst_47 {dimension_numbers = #tpu.dot_dimension_numbers<[1], [0], [0], [1], [0, 0, 1, 1], [], []>} : vector<4x32xbf16>, vector<32x128xbf16>, vector<4x128xf32> -> vector<4x128xf32>
    %87 = arith.addf %84, %86 : vector<4x128xf32>
    %88 = vector.broadcast %82 : vector<1x128xf32> to vector<4x128xf32>
    %89 = arith.addf %87, %88 : vector<4x128xf32>
    %c0_48 = arith.constant 0 : index
    %c0_49 = arith.constant 0 : index
    %90 = vector.load %arg17[%c0_48, %c0_49] : memref<4x128xf32, #tpu.memory_space<vmem>>, vector<4x128xf32>
    tpu.vector_store %arg17[%c0_48, %c0_49], %89 {strides = array<i32>} : memref<4x128xf32, #tpu.memory_space<vmem>>, vector<4x128xf32>,
    return
  }
  func.func @transform_0(%arg0: i32) -> (i32, i32) {
    %c0_i32 = arith.constant 0 : i32
    %c0_i32_0 = arith.constant 0 : i32
    %c0_i32_1 = arith.constant 0 : i32
    return %c0_i32, %c0_i32_0 : i32, i32
  }
  func.func @transform_1(%arg0: i32) -> (i32, i32) {
    %c0_i32 = arith.constant 0 : i32
    %c0_i32_0 = arith.constant 0 : i32
    %c0_i32_1 = arith.constant 0 : i32
    return %c0_i32, %c0_i32_0 : i32, i32
  }
  func.func @transform_2(%arg0: i32) -> (i32, i32, i32) {
    %c0_i32 = arith.constant 0 : i32
    %c0_i32_0 = arith.constant 0 : i32
    %c0_i32_1 = arith.constant 0 : i32
    %c0_i32_2 = arith.constant 0 : i32
    return %c0_i32, %c0_i32_0, %c0_i32_1 : i32, i32, i32
  }
  func.func @transform_3(%arg0: i32) -> (i32, i32, i32) {
    %c0_i32 = arith.constant 0 : i32
    %c0_i32_0 = arith.constant 0 : i32
    %c0_i32_1 = arith.constant 0 : i32
    %c0_i32_2 = arith.constant 0 : i32
    return %c0_i32, %c0_i32_0, %c0_i32_1 : i32, i32, i32
  }
  func.func @transform_4(%arg0: i32) -> (i32, i32) {
    %c0_i32 = arith.constant 0 : i32
    %c0_i32_0 = arith.constant 0 : i32
    %c0_i32_1 = arith.constant 0 : i32
    return %c0_i32, %c0_i32_0 : i32, i32
  }
  func.func @transform_5(%arg0: i32) -> (i32, i32) {
    %c0_i32 = arith.constant 0 : i32
    %c0_i32_0 = arith.constant 0 : i32
    %c0_i32_1 = arith.constant 0 : i32
    return %c0_i32, %c0_i32_0 : i32, i32
  }
  func.func @transform_6(%arg0: i32) -> (i32, i32) {
    %c0_i32 = arith.constant 0 : i32
    %c0_i32_0 = arith.constant 0 : i32
    %c0_i32_1 = arith.constant 0 : i32
    return %c0_i32, %c0_i32_0 : i32, i32
  }
  func.func @transform_7(%arg0: i32) -> (i32, i32) {
    %c0_i32 = arith.constant 0 : i32
    %c0_i32_0 = arith.constant 0 : i32
    %c0_i32_1 = arith.constant 0 : i32
    return %c0_i32, %c0_i32_0 : i32, i32
  }
  func.func @transform_8(%arg0: i32) -> (i32, i32) {
    %c0_i32 = arith.constant 0 : i32
    %c0_i32_0 = arith.constant 0 : i32
    %c0_i32_1 = arith.constant 0 : i32
    return %c0_i32, %c0_i32_0 : i32, i32
  }
  func.func @transform_9(%arg0: i32) -> (i32, i32) {
    %c0_i32 = arith.constant 0 : i32
    %c0_i32_0 = arith.constant 0 : i32
    %c0_i32_1 = arith.constant 0 : i32
    return %c0_i32, %c0_i32_0 : i32, i32
  }
  func.func @transform_10(%arg0: i32) -> (i32, i32) {
    %c0_i32 = arith.constant 0 : i32
    %c0_i32_0 = arith.constant 0 : i32
    %c0_i32_1 = arith.constant 0 : i32
    return %c0_i32, %c0_i32_0 : i32, i32
  }
  func.func @transform_11(%arg0: i32) -> (i32, i32) {
    %c0_i32 = arith.constant 0 : i32
    %c0_i32_0 = arith.constant 0 : i32
    %c0_i32_1 = arith.constant 0 : i32
    return %c0_i32, %c0_i32_0 : i32, i32
  }
  func.func @transform_12(%arg0: i32) -> (i32, i32) {
    %c0_i32 = arith.constant 0 : i32
    %c0_i32_0 = arith.constant 0 : i32
    %c0_i32_1 = arith.constant 0 : i32
    return %c0_i32, %c0_i32_0 : i32, i32
  }
  func.func @transform_13(%arg0: i32) -> (i32, i32) {
    %c0_i32 = arith.constant 0 : i32
    %c0_i32_0 = arith.constant 0 : i32
    return %c0_i32, %arg0 : i32, i32
  }
  func.func @transform_14(%arg0: i32) -> (i32, i32) {
    %c0_i32 = arith.constant 0 : i32
    %c0_i32_0 = arith.constant 0 : i32
    return %c0_i32, %arg0 : i32, i32
  }
  func.func @transform_15(%arg0: i32) -> (i32, i32) {
    %c0_i32 = arith.constant 0 : i32
    %c0_i32_0 = arith.constant 0 : i32
    return %c0_i32, %arg0 : i32, i32
  }
  func.func @transform_16(%arg0: i32) -> (i32, i32) {
    %c0_i32 = arith.constant 0 : i32
    %c0_i32_0 = arith.constant 0 : i32
    return %c0_i32, %arg0 : i32, i32
  }
  func.func @transform_17(%arg0: i32) -> (i32, i32) {
    %c0_i32 = arith.constant 0 : i32
    %c0_i32_0 = arith.constant 0 : i32
    %c0_i32_1 = arith.constant 0 : i32
    return %c0_i32, %c0_i32_0 : i32, i32
  }
}

</mosaic_0001>

<llo_original>
// kernel: tpu_custom_call.1
$region0: #{tpu_custom_call.1}
  #allocation0 [shape = 'u32[]', space=smem, size = 0x4, offset = 0x4, fixed_abs, tag = 'smem constant byte address 0x4 - core index']
  #allocation1 [shape = 'u32[144,128]{1,0:T(1,128)}', space=vmem, size = 0x12000, scoped, tag = 'internal scratch']
  #allocation2 [shape = 'f32[1,1]{1,0:T(1,128)S(6)}', space=smem, size = 0x200, scoped, tag = 'scoped memory for tpu_custom_call.1']
  %s0 = inlined_call_operand.hbm [shape: f32[4,32], index: 0, kind: input, shape index: {}]
  %s1 = inlined_call_operand.hbm [shape: f32[4,32], index: 1, kind: input, shape index: {}]
  %s2 = inlined_call_operand.hbm [shape: f32[4,8,32], index: 2, kind: input, shape index: {}]
  %s3 = inlined_call_operand.hbm [shape: f32[4,8,32], index: 3, kind: input, shape index: {}]
  %s4 = inlined_call_operand.hbm [shape: f32[4,8], index: 4, kind: input, shape index: {}]
  %s5 = inlined_call_operand.hbm [shape: bf16[32,384], index: 5, kind: input, shape index: {}]
  %s6 = inlined_call_operand.hbm [shape: bf16[32,384], index: 6, kind: input, shape index: {}]
  %s7 = inlined_call_operand.hbm [shape: f32[1,384], index: 7, kind: input, shape index: {}]
  %s8 = inlined_call_operand.hbm [shape: f32[1,384], index: 8, kind: input, shape index: {}]
  %s9 = inlined_call_operand.vmem [shape: bf16[32,32], index: 9, kind: input, shape index: {}]
  %s10 = inlined_call_operand.vmem [shape: f32[1,32], index: 10, kind: input, shape index: {}]
  %s11 = inlined_call_operand.vmem [shape: f32[1,32], index: 11, kind: input, shape index: {}]
  %s12 = inlined_call_operand.<no memory space> [shape: f32[1,1], index: 12, kind: input, shape index: {}]
  %s13 = inlined_call_operand.hbm [shape: bf16[32,128], index: 13, kind: input, shape index: {}]
  %s14 = inlined_call_operand.hbm [shape: bf16[32,128], index: 14, kind: input, shape index: {}]
  %s15 = inlined_call_operand.vmem [shape: f32[1,128], index: 15, kind: input, shape index: {}]
  %s16 = inlined_call_operand.hbm [shape: f32[4,128], index: 16, kind: output, shape index: {0}]
  %s17 = inlined_call_operand.hbm [shape: f32[4,32], index: 17, kind: output, shape index: {1}]
  %18 = xla_tuple %s16, %s17
  %s19 = sld [smem:[#allocation0]]
  $region126: #{tpu_custom_call.1} parent=0
    _
  %s21 = ssub.s32 1, %s19
  %s22 = scalar_select 0, %s21, %s19
  %23 = sst [smem:[#allocation2]] %s12
  $region1: #{tpu_custom_call.1} parent=0
    #allocation3 [shape = 'u8[2048]{0}', space=vmem, size = 0x800, scoped, tag = 'input window, operand 0, single buffered']
    #allocation4 [shape = 's32[1]{0}', space=sflag, size = 0x4, scoped, tag = 'scoped memory for tpu_custom_call.1']
    #allocation5 [shape = 's32[1]{0}', space=sflag, size = 0x4, scoped, tag = 'scoped memory for tpu_custom_call.1']
    #allocation6 [shape = 'u8[2048]{0}', space=vmem, size = 0x800, scoped, tag = 'input window, operand 1, single buffered']
    #allocation7 [shape = 's32[1]{0}', space=sflag, size = 0x4, scoped, tag = 'scoped memory for tpu_custom_call.1']
    #allocation8 [shape = 'u8[16384]{0}', space=vmem, size = 0x4000, scoped, tag = 'input window, operand 2, single buffered']
    #allocation9 [shape = 'u8[16384]{0}', space=vmem, size = 0x4000, scoped, tag = 'input window, operand 3, single buffered']
    #allocation10 [shape = 's32[1]{0}', space=sflag, size = 0x4, scoped, tag = 'scoped memory for tpu_custom_call.1']
    #allocation11 [shape = 'u8[2048]{0}', space=vmem, size = 0x800, scoped, tag = 'input window, operand 4, single buffered']
    #allocation12 [shape = 'u8[24576]{0}', space=vmem, size = 0x6000, scoped, tag = 'input window, operand 5, single buffered']
    #allocation13 [shape = 's32[1]{0}', space=sflag, size = 0x4, scoped, tag = 'scoped memory for tpu_custom_call.1']
    #allocation14 [shape = 'u8[24576]{0}', space=vmem, size = 0x6000, scoped, tag = 'input window, operand 6, single buffered']
    #allocation15 [shape = 'u8[1536]{0}', space=vmem, size = 0x800, scoped, tag = 'input window, operand 7, single buffered']
    #allocation16 [shape = 's32[1]{0}', space=sflag, size = 0x4, scoped, tag = 'scoped memory for tpu_custom_call.1']
    #allocation17 [shape = 'u8[1536]{0}', space=vmem, size = 0x800, scoped, tag = 'input window, operand 8, single buffered']
    #allocation18 [shape = 'u8[8192]{0}', space=vmem, size = 0x2000, scoped, tag = 'input window, operand 13, single buffered']
    #allocation19 [shape = 's32[1]{0}', space=sflag, size = 0x4, scoped, tag = 'scoped memory for tpu_custom_call.1']
    #allocation20 [shape = 'u8[8192]{0}', space=vmem, size = 0x2000, scoped, tag = 'input window, operand 14, single buffered']
    #allocation21 [shape = 'u8[2048]{0}', space=vmem, size = 0x800, scoped, tag = 'output window, operand 0, single buffered']
    #allocation22 [shape = 'u8[2048]{0}', space=vmem, size = 0x800, scoped, tag = 'output window, operand 1, single buffered']
    #allocation23 [shape = 's32[1]{0}', space=sflag, size = 0x4, scoped, tag = 'scoped memory for tpu_custom_call.1']
    %24 = vsyncpa [#allocation4], 0
    %25 = vsyncpa [#allocation7], 0
    %26 = vsyncpa [#allocation10], 0
    %27 = vsyncpa [#allocation13], 0
    %28 = vsyncpa [#allocation16], 0
    %29 = vsyncpa [#allocation19], 0
    %30 = vsyncpa [#allocation5], 0
    %31 = vsyncpa [#allocation23], 0
    // Predicated region
    $region2: #{tpu_custom_call.1} parent=1 // pred_check
      _
    $region3: #{tpu_custom_call.1} parent=1 // pred_check_branch
      %33 = sbr.rel (0) target = $region5
    $region4: #{tpu_custom_call.1} parent=1 // pred_region
      %s35 = ssub.s32 64, 64
      %36 = vsyncadd [#allocation4], %s35
      %s38 = sshll.u32 [#allocation3], 4
      %s39 = int_to_ptr.vmem [resolvable:$true] %s38
      %41 = dma.hbm_to_vmem [thread:$0]  %s0, 64, %s39, [#allocation4]
    $region5: #{tpu_custom_call.1} parent=1 // pred_fallthru
      _
    // Predicated region
    $region6: #{tpu_custom_call.1} parent=1 // pred_check
      _
    $region7: #{tpu_custom_call.1} parent=1 // pred_check_branch
      %43 = sbr.rel (0) target = $region9
    $region8: #{tpu_custom_call.1} parent=1 // pred_region
      %s45 = ssub.s32 64, 64
      %46 = vsyncadd [#allocation7], %s45
      %s48 = sshll.u32 [#allocation6], 4
      %s49 = int_to_ptr.vmem [resolvable:$true] %s48
      %51 = dma.hbm_to_vmem [thread:$0]  %s1, 64, %s49, [#allocation7]
    $region9: #{tpu_custom_call.1} parent=1 // pred_fallthru
      _
    // Predicated region
    $region10: #{tpu_custom_call.1} parent=1 // pred_check
      _
    $region11: #{tpu_custom_call.1} parent=1 // pred_check_branch
      %53 = sbr.rel (0) target = $region13
    $region12: #{tpu_custom_call.1} parent=1 // pred_region
      %s55 = ssub.s32 512, 512
      %56 = vsyncadd [#allocation7], %s55
      %s57 = sshll.u32 [#allocation8], 4
      %s58 = int_to_ptr.vmem [resolvable:$true] %s57
      %63 = dma.hbm_to_vmem [thread:$0]  %s2, 512, %s58, [#allocation7], 128, 128, 8
    $region13: #{tpu_custom_call.1} parent=1 // pred_fallthru
      _
    // Predicated region
    $region14: #{tpu_custom_call.1} parent=1 // pred_check
      _
    $region15: #{tpu_custom_call.1} parent=1 // pred_check_branch
      %65 = sbr.rel (0) target = $region17
    $region16: #{tpu_custom_call.1} parent=1 // pred_region
      %s67 = ssub.s32 512, 512
      %68 = vsyncadd [#allocation10], %s67
      %s69 = sshll.u32 [#allocation9], 4
      %s70 = int_to_ptr.vmem [resolvable:$true] %s69
      %75 = dma.hbm_to_vmem [thread:$0]  %s3, 512, %s70, [#allocation10], 128, 128, 8
    $region17: #{tpu_custom_call.1} parent=1 // pred_fallthru
      _
    // Predicated region
    $region18: #{tpu_custom_call.1} parent=1 // pred_check
      _
    $region19: #{tpu_custom_call.1} parent=1 // pred_check_branch
      %77 = sbr.rel (0) target = $region21
    $region20: #{tpu_custom_call.1} parent=1 // pred_region
      %s79 = ssub.s32 64, 64
      %80 = vsyncadd [#allocation10], %s79
      %s82 = sshll.u32 [#allocation11], 4
      %s83 = int_to_ptr.vmem [resolvable:$true] %s82
      %85 = dma.hbm_to_vmem [thread:$0]  %s4, 64, %s83, [#allocation10]
    $region21: #{tpu_custom_call.1} parent=1 // pred_fallthru
      _
    // Predicated region
    $region22: #{tpu_custom_call.1} parent=1 // pred_check
      _
    $region23: #{tpu_custom_call.1} parent=1 // pred_check_branch
      %87 = sbr.rel (0) target = $region25
    $region24: #{tpu_custom_call.1} parent=1 // pred_region
      %s89 = ssub.s32 768, 768
      %90 = vsyncadd [#allocation13], %s89
      %s91 = sshll.u32 [#allocation12], 4
      %s92 = int_to_ptr.vmem [resolvable:$true] %s91
      %97 = dma.hbm_to_vmem [thread:$0]  %s5, 768, %s92, [#allocation13], 192, 192, 12
    $region25: #{tpu_custom_call.1} parent=1 // pred_fallthru
      _
    // Predicated region
    $region26: #{tpu_custom_call.1} parent=1 // pred_check
      _
    $region27: #{tpu_custom_call.1} parent=1 // pred_check_branch
      %99 = sbr.rel (0) target = $region29
    $region28: #{tpu_custom_call.1} parent=1 // pred_region
      %s101 = ssub.s32 768, 768
      %102 = vsyncadd [#allocation13], %s101
      %s103 = sshll.u32 [#allocation14], 4
      %s104 = int_to_ptr.vmem [resolvable:$true] %s103
      %109 = dma.hbm_to_vmem [thread:$0]  %s6, 768, %s104, [#allocation13], 192, 192, 12
    $region29: #{tpu_custom_call.1} parent=1 // pred_fallthru
      _
    // Predicated region
    $region30: #{tpu_custom_call.1} parent=1 // pred_check
      _
    $region31: #{tpu_custom_call.1} parent=1 // pred_check_branch
      %111 = sbr.rel (0) target = $region33
    $region32: #{tpu_custom_call.1} parent=1 // pred_region
      %s113 = ssub.s32 48, 48
      %114 = vsyncadd [#allocation16], %s113
      %s116 = sshll.u32 [#allocation15], 4
      %s117 = int_to_ptr.vmem [resolvable:$true] %s116
      %119 = dma.hbm_to_vmem [thread:$0]  %s7, 48, %s117, [#allocation16]
    $region33: #{tpu_custom_call.1} parent=1 // pred_fallthru
      _
    // Predicated region
    $region34: #{tpu_custom_call.1} parent=1 // pred_check
      _
    $region35: #{tpu_custom_call.1} parent=1 // pred_check_branch
      %121 = sbr.rel (0) target = $region37
    $region36: #{tpu_custom_call.1} parent=1 // pred_region
      %s123 = ssub.s32 48, 48
      %124 = vsyncadd [#allocation16], %s123
      %s126 = sshll.u32 [#allocation17], 4
      %s127 = int_to_ptr.vmem [resolvable:$true] %s126
      %129 = dma.hbm_to_vmem [thread:$0]  %s8, 48, %s127, [#allocation16]
    $region37: #{tpu_custom_call.1} parent=1 // pred_fallthru
      _
    // Predicated region
    $region38: #{tpu_custom_call.1} parent=1 // pred_check
      _
    $region39: #{tpu_custom_call.1} parent=1 // pred_check_branch
      %131 = sbr.rel (0) target = $region41
    $region40: #{tpu_custom_call.1} parent=1 // pred_region
      _
    $region41: #{tpu_custom_call.1} parent=1 // pred_fallthru
      _
    // Predicated region
    $region42: #{tpu_custom_call.1} parent=1 // pred_check
      _
    $region43: #{tpu_custom_call.1} parent=1 // pred_check_branch
      %133 = sbr.rel (0) target = $region45
    $region44: #{tpu_custom_call.1} parent=1 // pred_region
      _
    $region45: #{tpu_custom_call.1} parent=1 // pred_fallthru
      _
    // Predicated region
    $region46: #{tpu_custom_call.1} parent=1 // pred_check
      _
    $region47: #{tpu_custom_call.1} parent=1 // pred_check_branch
      %135 = sbr.rel (0) target = $region49
    $region48: #{tpu_custom_call.1} parent=1 // pred_region
      _
    $region49: #{tpu_custom_call.1} parent=1 // pred_fallthru
      _
    // Predicated region
    $region50: #{tpu_custom_call.1} parent=1 // pred_check
      _
    $region51: #{tpu_custom_call.1} parent=1 // pred_check_branch
      %137 = sbr.rel (0) target = $region53
    $region52: #{tpu_custom_call.1} parent=1 // pred_region
      _
    $region53: #{tpu_custom_call.1} parent=1 // pred_fallthru
      _
    // Predicated region
    $region54: #{tpu_custom_call.1} parent=1 // pred_check
      _
    $region55: #{tpu_custom_call.1} parent=1 // pred_check_branch
      %139 = sbr.rel (0) target = $region57
    $region56: #{tpu_custom_call.1} parent=1 // pred_region
      %s141 = ssub.s32 256, 256
      %142 = vsyncadd [#allocation19], %s141
      %s143 = sshll.u32 [#allocation18], 4
      %s144 = int_to_ptr.vmem [resolvable:$true] %s143
      %149 = dma.hbm_to_vmem [thread:$0]  %s13, 256, %s144, [#allocation19], 64, 64, 4
    $region57: #{tpu_custom_call.1} parent=1 // pred_fallthru
      _
    // Predicated region
    $region58: #{tpu_custom_call.1} parent=1 // pred_check
      _
    $region59: #{tpu_custom_call.1} parent=1 // pred_check_branch
      %151 = sbr.rel (0) target = $region61
    $region60: #{tpu_custom_call.1} parent=1 // pred_region
      %s153 = ssub.s32 256, 256
      %154 = vsyncadd [#allocation19], %s153
      %s155 = sshll.u32 [#allocation20], 4
      %s156 = int_to_ptr.vmem [resolvable:$true] %s155
      %161 = dma.hbm_to_vmem [thread:$0]  %s14, 256, %s156, [#allocation19], 64, 64, 4
    $region61: #{tpu_custom_call.1} parent=1 // pred_fallthru
      _
    // Predicated region
    $region62: #{tpu_custom_call.1} parent=1 // pred_check
      _
    $region63: #{tpu_custom_call.1} parent=1 // pred_check_branch
      %163 = sbr.rel (0) target = $region65
    $region64: #{tpu_custom_call.1} parent=1 // pred_region
      _
    $region65: #{tpu_custom_call.1} parent=1 // pred_fallthru
      _
    // Predicated region
    $region66: #{tpu_custom_call.1} parent=1 // pred_check
      _
    $region67: #{tpu_custom_call.1} parent=1 // pred_check_branch
      %165 = sbr.rel (0) target = $region69
    $region68: #{tpu_custom_call.1} parent=1 // pred_region
      %166 = dma.done [#allocation4], 64
    $region69: #{tpu_custom_call.1} parent=1 // pred_fallthru
      _
    // Predicated region
    $region70: #{tpu_custom_call.1} parent=1 // pred_check
      _
    $region71: #{tpu_custom_call.1} parent=1 // pred_check_branch
      %168 = sbr.rel (0) target = $region73
    $region72: #{tpu_custom_call.1} parent=1 // pred_region
      %169 = dma.done [#allocation7], 64
    $region73: #{tpu_custom_call.1} parent=1 // pred_fallthru
      _
    // Predicated region
    $region74: #{tpu_custom_call.1} parent=1 // pred_check
      _
    $region75: #{tpu_custom_call.1} parent=1 // pred_check_branch
      %171 = sbr.rel (0) target = $region77
    $region76: #{tpu_custom_call.1} parent=1 // pred_region
      %172 = dma.done [#allocation7], 512
    $region77: #{tpu_custom_call.1} parent=1 // pred_fallthru
      _
    // Predicated region
    $region78: #{tpu_custom_call.1} parent=1 // pred_check
      _
    $region79: #{tpu_custom_call.1} parent=1 // pred_check_branch
      %174 = sbr.rel (0) target = $region81
    $region80: #{tpu_custom_call.1} parent=1 // pred_region
      %175 = dma.done [#allocation10], 512
    $region81: #{tpu_custom_call.1} parent=1 // pred_fallthru
      _
    // Predicated region
    $region82: #{tpu_custom_call.1} parent=1 // pred_check
      _
    $region83: #{tpu_custom_call.1} parent=1 // pred_check_branch
      %177 = sbr.rel (0) target = $region85
    $region84: #{tpu_custom_call.1} parent=1 // pred_region
      %178 = dma.done [#allocation10], 64
    $region85: #{tpu_custom_call.1} parent=1 // pred_fallthru
      _
    // Predicated region
    $region86: #{tpu_custom_call.1} parent=1 // pred_check
      _
    $region87: #{tpu_custom_call.1} parent=1 // pred_check_branch
      %180 = sbr.rel (0) target = $region89
    $region88: #{tpu_custom_call.1} parent=1 // pred_region
      %181 = dma.done [#allocation13], 768
    $region89: #{tpu_custom_call.1} parent=1 // pred_fallthru
      _
    // Predicated region
    $region90: #{tpu_custom_call.1} parent=1 // pred_check
      _
    $region91: #{tpu_custom_call.1} parent=1 // pred_check_branch
      %183 = sbr.rel (0) target = $region93
    $region92: #{tpu_custom_call.1} parent=1 // pred_region
      %184 = dma.done [#allocation13], 768
    $region93: #{tpu_custom_call.1} parent=1 // pred_fallthru
      _
    // Predicated region
    $region94: #{tpu_custom_call.1} parent=1 // pred_check
      _
    $region95: #{tpu_custom_call.1} parent=1 // pred_check_branch
      %186 = sbr.rel (0) target = $region97
    $region96: #{tpu_custom_call.1} parent=1 // pred_region
      %187 = dma.done [#allocation16], 48
    $region97: #{tpu_custom_call.1} parent=1 // pred_fallthru
      _
    // Predicated region
    $region98: #{tpu_custom_call.1} parent=1 // pred_check
      _
    $region99: #{tpu_custom_call.1} parent=1 // pred_check_branch
      %189 = sbr.rel (0) target = $region101
    $region100: #{tpu_custom_call.1} parent=1 // pred_region
      %190 = dma.done [#allocation16], 48
    $region101: #{tpu_custom_call.1} parent=1 // pred_fallthru
      _
    // Predicated region
    $region102: #{tpu_custom_call.1} parent=1 // pred_check
      _
    $region103: #{tpu_custom_call.1} parent=1 // pred_check_branch
      %192 = sbr.rel (0) target = $region105
    $region104: #{tpu_custom_call.1} parent=1 // pred_region
      %193 = dma.done [#allocation19], 256
    $region105: #{tpu_custom_call.1} parent=1 // pred_fallthru
      _
    // Predicated region
    $region106: #{tpu_custom_call.1} parent=1 // pred_check
      _
    $region107: #{tpu_custom_call.1} parent=1 // pred_check_branch
      %195 = sbr.rel (0) target = $region109
    $region108: #{tpu_custom_call.1} parent=1 // pred_region
      %196 = dma.done [#allocation19], 256
    $region109: #{tpu_custom_call.1} parent=1 // pred_fallthru
      _
    %v198 = vld [vmem:[#allocation3] sm:$0xf]
    %v199 = vld [vmem:[#allocation6] sm:$0xf]
    %v200 = vld [vmem:[#allocation8] sm:$0xff]
    %v201 = vld [vmem:[#allocation8 + $0x8] sm:$0xff]
    %v202 = vld [vmem:[#allocation8 + $0x10] sm:$0xff]
    %v203 = vld [vmem:[#allocation8 + $0x18] sm:$0xff]
    %v204 = vld [vmem:[#allocation9] sm:$0xff]
    %v205 = vld [vmem:[#allocation9 + $0x8] sm:$0xff]
    %v206 = vld [vmem:[#allocation9 + $0x10] sm:$0xff]
    %v207 = vld [vmem:[#allocation9 + $0x18] sm:$0xff]
    %v208 = vld [vmem:[#allocation11] sm:$0xf]
    %v209 = vld [vmem:[#allocation12] sm:$0xff]
    %v210 = vld [vmem:[#allocation12 + $0x8] sm:$0xf]
    %v211 = vld [vmem:[#allocation12 + $0xc] sm:$0xff]
    %v212 = vld [vmem:[#allocation12 + $0x14] sm:$0xf]
    %v213 = vld [vmem:[#allocation12 + $0x18] sm:$0xff]
    %v214 = vld [vmem:[#allocation12 + $0x20] sm:$0xf]
    %v215 = vld [vmem:[#allocation12 + $0x24] sm:$0xff]
    %v216 = vld [vmem:[#allocation12 + $0x2c] sm:$0xf]
    %v217 = vld [vmem:[#allocation14] sm:$0xff]
    %v218 = vld [vmem:[#allocation14 + $0x8] sm:$0xf]
    %v219 = vld [vmem:[#allocation14 + $0xc] sm:$0xff]
    %v220 = vld [vmem:[#allocation14 + $0x14] sm:$0xf]
    %v221 = vld [vmem:[#allocation14 + $0x18] sm:$0xff]
    %v222 = vld [vmem:[#allocation14 + $0x20] sm:$0xf]
    %v223 = vld [vmem:[#allocation14 + $0x24] sm:$0xff]
    %v224 = vld [vmem:[#allocation14 + $0x2c] sm:$0xf]
    %v225 = vld [vmem:[#allocation15] sm:$0x7]
    %v226 = vld [vmem:[#allocation17] sm:$0x7]
    %v227 = vld [vmem:[%s9] sm:$0xf]
    %v228 = vld [vmem:[%s9 + $0x4] sm:$0xf]
    %v229 = vld [vmem:[%s9 + $0x8] sm:$0xf]
    %v230 = vld [vmem:[%s9 + $0xc] sm:$0xf]
    %v231 = vld [vmem:[%s10] sm:$0x1]
    %v232 = vld [vmem:[%s11] sm:$0x1]
    %s233 = sld [smem:[#allocation2]]
    %v234 = vpack.c.bf16 %v198, %v198
    %v235 = vpack.c.bf16 %v199, %v199
    %v237 = vlaneseq
    %v238 = vshrl.u32 %v237, 7
    %v239 = vsub.s32 0, %v238
    %v240 = vrot.slane %v225, %v239
    %v241 = vlaneseq
    %v242 = vshrl.u32 %v241, 7
    %v243 = vsub.s32 1, %v242
    %v244 = vrot.slane %v225, %v243
    %v245 = vlaneseq
    %v246 = vshrl.u32 %v245, 7
    %v247 = vsub.s32 2, %v246
    %v248 = vrot.slane %v225, %v247
    %v260 = vunpack.c.l.b16 %v209
    %v261 = vunpack.c.h.b16 %v209
    %v262 = vunpack.c.l.b16 %v210
    %v263 = vunpack.c.l.b16 %v211
    %v264 = vunpack.c.h.b16 %v211
    %v265 = vunpack.c.l.b16 %v212
    %v266 = vunpack.c.l.b16 %v213
    %v267 = vunpack.c.h.b16 %v213
    %v268 = vunpack.c.l.b16 %v214
    %v269 = vunpack.c.l.b16 %v215
    %v270 = vunpack.c.h.b16 %v215
    %v271 = vunpack.c.l.b16 %v216
    %v272 = vpack.c.b16 %v263, %v260
    %v273 = vpack.c.b16 %v264, %v261
    %v274 = vpack.c.b16 %v265, %v262
    %v275 = vpack.c.b16 %v269, %v266
    %v276 = vpack.c.b16 %v270, %v267
    %v277 = vpack.c.b16 %v271, %v268
    %vm284 = vcmask 261120
    %v286 = vsel %vm284, %v234, 0
    %288 = vmatprep.subr.bf16.mxu0 0
    %289 = vmatpush1.bf16.msra.mxu0 0
    %290 = vmatprep.subr.bf16.mxu0 0
    %291 = vmatpush1.bf16.msra.mxu0 0
    %292 = vmatprep.subr.bf16.mxu0 0
    %293 = vmatpush1.bf16.msra.mxu0 0
    %294 = vmatprep.subr.bf16.mxu0 0
    %295 = vmatpush1.bf16.msra.mxu0 0
    %296 = vmatprep.subr.bf16.mxu0 0
    %297 = vmatpush1.bf16.msra.mxu0 0
    %298 = vmatprep.subr.bf16.mxu0 0
    %299 = vmatpush1.bf16.msra.mxu0 0
    %300 = vmatprep.subr.bf16.mxu0 %v276
    %301 = vmatpush1.bf16.msra.mxu0 %v275
    %302 = vmatprep.subr.bf16.mxu0 %v273
    %303 = vmatpush1.bf16.msra.mxu0 %v272
    %304 = vmatprep.subr.bf16.mxu0 0
    %305 = vmatpush2.bf16.msra.mxu0 0
    %306 = vmatprep.subr.bf16.mxu0 0
    %307 = vmatpush2.bf16.msra.mxu0 0
    %308 = vmatprep.subr.bf16.mxu0 0
    %309 = vmatpush2.bf16.msra.mxu0 0
    %310 = vmatprep.subr.bf16.mxu0 0
    %311 = vmatpush2.bf16.msra.mxu0 0
    %312 = vmatprep.subr.bf16.mxu0 0
    %313 = vmatpush2.bf16.msra.mxu0 0
    %314 = vmatprep.subr.bf16.mxu0 0
    %315 = vmatpush2.bf16.msra.mxu0 0
    %316 = vmatprep.subr.bf16.mxu0 0
    %317 = vmatpush2.bf16.msra.mxu0 0
    %318 = vmatprep.subr.bf16.mxu0 0
    %319 = vmatpush2.bf16.msra.mxu0 0
    %320 = vmatprep.mubr.bf16.mxu0 0
    %321 = vmatmul.mubr.bf16.gmra.mxu0 %v286
    %v322 = vpop.f32.mrf.mxu0
    %v323 = vadd.f32 %v240, %v322
    %v324 = vpop.f32.mrf.mxu0
    %v325 = vadd.f32 %v244, %v324
    %v326 = vpop.f32.mrf.mxu0
    %v327 = vpop.f32.mrf.mxu0
    %328 = vdwg.mxu0
    %329 = vmatprep.subr.bf16.mxu0 0
    %330 = vmatpush1.bf16.msra.mxu0 0
    %331 = vmatprep.subr.bf16.mxu0 0
    %332 = vmatpush1.bf16.msra.mxu0 0
    %333 = vmatprep.subr.bf16.mxu0 0
    %334 = vmatpush1.bf16.msra.mxu0 0
    %335 = vmatprep.subr.bf16.mxu0 0
    %336 = vmatpush1.bf16.msra.mxu0 0
    %337 = vmatprep.subr.bf16.mxu0 0
    %338 = vmatpush1.bf16.msra.mxu0 0
    %339 = vmatprep.subr.bf16.mxu0 0
    %340 = vmatpush1.bf16.msra.mxu0 0
    %341 = vmatprep.subr.bf16.mxu0 0
    %342 = vmatpush1.bf16.msra.mxu0 %v277
    %343 = vmatprep.subr.bf16.mxu0 0
    %344 = vmatpush1.bf16.msra.mxu0 %v274
    %345 = vmatprep.subr.bf16.mxu0 0
    %346 = vmatpush2.bf16.msra.mxu0 0
    %347 = vmatprep.subr.bf16.mxu0 0
    %348 = vmatpush2.bf16.msra.mxu0 0
    %349 = vmatprep.subr.bf16.mxu0 0
    %350 = vmatpush2.bf16.msra.mxu0 0
    %351 = vmatprep.subr.bf16.mxu0 0
    %352 = vmatpush2.bf16.msra.mxu0 0
    %353 = vmatprep.subr.bf16.mxu0 0
    %354 = vmatpush2.bf16.msra.mxu0 0
    %355 = vmatprep.subr.bf16.mxu0 0
    %356 = vmatpush2.bf16.msra.mxu0 0
    %357 = vmatprep.subr.bf16.mxu0 0
    %358 = vmatpush2.bf16.msra.mxu0 0
    %359 = vmatprep.subr.bf16.mxu0 0
    %360 = vmatpush2.bf16.msra.mxu0 0
    %361 = vmatprep.mubr.bf16.mxu0 0
    %362 = vmatmul.mubr.bf16.gmra.mxu0 %v286
    %v363 = vpop.f32.mrf.mxu0
    %v364 = vadd.f32 %v248, %v363
    %v365 = vpop.f32.mrf.mxu0
    %v366 = vpop.f32.mrf.mxu0
    %v367 = vpop.f32.mrf.mxu0
    %368 = vdwg.mxu0
    %v370 = vlaneseq
    %v371 = vshrl.u32 %v370, 7
    %v372 = vsub.s32 0, %v371
    %v373 = vrot.slane %v226, %v372
    %v374 = vlaneseq
    %v375 = vshrl.u32 %v374, 7
    %v376 = vsub.s32 1, %v375
    %v377 = vrot.slane %v226, %v376
    %v378 = vlaneseq
    %v379 = vshrl.u32 %v378, 7
    %v380 = vsub.s32 2, %v379
    %v381 = vrot.slane %v226, %v380
    %v393 = vunpack.c.l.b16 %v217
    %v394 = vunpack.c.h.b16 %v217
    %v395 = vunpack.c.l.b16 %v218
    %v396 = vunpack.c.l.b16 %v219
    %v397 = vunpack.c.h.b16 %v219
    %v398 = vunpack.c.l.b16 %v220
    %v399 = vunpack.c.l.b16 %v221
    %v400 = vunpack.c.h.b16 %v221
    %v401 = vunpack.c.l.b16 %v222
    %v402 = vunpack.c.l.b16 %v223
    %v403 = vunpack.c.h.b16 %v223
    %v404 = vunpack.c.l.b16 %v224
    %v405 = vpack.c.b16 %v396, %v393
    %v406 = vpack.c.b16 %v397, %v394
    %v407 = vpack.c.b16 %v398, %v395
    %v408 = vpack.c.b16 %v402, %v399
    %v409 = vpack.c.b16 %v403, %v400
    %v410 = vpack.c.b16 %v404, %v401
    %v418 = vsel %vm284, %v235, 0
    %420 = vmatprep.subr.bf16.mxu0 0
    %421 = vmatpush1.bf16.msra.mxu0 0
    %422 = vmatprep.subr.bf16.mxu0 0
    %423 = vmatpush1.bf16.msra.mxu0 0
    %424 = vmatprep.subr.bf16.mxu0 0
    %425 = vmatpush1.bf16.msra.mxu0 0
    %426 = vmatprep.subr.bf16.mxu0 0
    %427 = vmatpush1.bf16.msra.mxu0 0
    %428 = vmatprep.subr.bf16.mxu0 0
    %429 = vmatpush1.bf16.msra.mxu0 0
    %430 = vmatprep.subr.bf16.mxu0 0
    %431 = vmatpush1.bf16.msra.mxu0 0
    %432 = vmatprep.subr.bf16.mxu0 %v409
    %433 = vmatpush1.bf16.msra.mxu0 %v408
    %434 = vmatprep.subr.bf16.mxu0 %v406
    %435 = vmatpush1.bf16.msra.mxu0 %v405
    %436 = vmatprep.subr.bf16.mxu0 0
    %437 = vmatpush2.bf16.msra.mxu0 0
    %438 = vmatprep.subr.bf16.mxu0 0
    %439 = vmatpush2.bf16.msra.mxu0 0
    %440 = vmatprep.subr.bf16.mxu0 0
    %441 = vmatpush2.bf16.msra.mxu0 0
    %442 = vmatprep.subr.bf16.mxu0 0
    %443 = vmatpush2.bf16.msra.mxu0 0
    %444 = vmatprep.subr.bf16.mxu0 0
    %445 = vmatpush2.bf16.msra.mxu0 0
    %446 = vmatprep.subr.bf16.mxu0 0
    %447 = vmatpush2.bf16.msra.mxu0 0
    %448 = vmatprep.subr.bf16.mxu0 0
    %449 = vmatpush2.bf16.msra.mxu0 0
    %450 = vmatprep.subr.bf16.mxu0 0
    %451 = vmatpush2.bf16.msra.mxu0 0
    %452 = vmatprep.mubr.bf16.mxu0 0
    %453 = vmatmul.mubr.bf16.gmra.mxu0 %v418
    %v454 = vpop.f32.mrf.mxu0
    %v455 = vadd.f32 %v373, %v454
    %v456 = vpop.f32.mrf.mxu0
    %v457 = vadd.f32 %v377, %v456
    %v458 = vpop.f32.mrf.mxu0
    %v459 = vpop.f32.mrf.mxu0
    %460 = vdwg.mxu0
    %461 = vmatprep.subr.bf16.mxu0 0
    %462 = vmatpush1.bf16.msra.mxu0 0
    %463 = vmatprep.subr.bf16.mxu0 0
    %464 = vmatpush1.bf16.msra.mxu0 0
    %465 = vmatprep.subr.bf16.mxu0 0
    %466 = vmatpush1.bf16.msra.mxu0 0
    %467 = vmatprep.subr.bf16.mxu0 0
    %468 = vmatpush1.bf16.msra.mxu0 0
    %469 = vmatprep.subr.bf16.mxu0 0
    %470 = vmatpush1.bf16.msra.mxu0 0
    %471 = vmatprep.subr.bf16.mxu0 0
    %472 = vmatpush1.bf16.msra.mxu0 0
    %473 = vmatprep.subr.bf16.mxu0 0
    %474 = vmatpush1.bf16.msra.mxu0 %v410
    %475 = vmatprep.subr.bf16.mxu0 0
    %476 = vmatpush1.bf16.msra.mxu0 %v407
    %477 = vmatprep.subr.bf16.mxu0 0
    %478 = vmatpush2.bf16.msra.mxu0 0
    %479 = vmatprep.subr.bf16.mxu0 0
    %480 = vmatpush2.bf16.msra.mxu0 0
    %481 = vmatprep.subr.bf16.mxu0 0
    %482 = vmatpush2.bf16.msra.mxu0 0
    %483 = vmatprep.subr.bf16.mxu0 0
    %484 = vmatpush2.bf16.msra.mxu0 0
    %485 = vmatprep.subr.bf16.mxu0 0
    %486 = vmatpush2.bf16.msra.mxu0 0
    %487 = vmatprep.subr.bf16.mxu0 0
    %488 = vmatpush2.bf16.msra.mxu0 0
    %489 = vmatprep.subr.bf16.mxu0 0
    %490 = vmatpush2.bf16.msra.mxu0 0
    %491 = vmatprep.subr.bf16.mxu0 0
    %492 = vmatpush2.bf16.msra.mxu0 0
    %493 = vmatprep.mubr.bf16.mxu0 0
    %494 = vmatmul.mubr.bf16.gmra.mxu0 %v418
    %v495 = vpop.f32.mrf.mxu0
    %v496 = vadd.f32 %v381, %v495
    %v497 = vpop.f32.mrf.mxu0
    %v498 = vpop.f32.mrf.mxu0
    %v499 = vpop.f32.mrf.mxu0
    %500 = vdwg.mxu0
    %v501 = vadd.f32 %v323, %v455
    %v502 = vxor.u32 %v501, 2147483648
    %v503 = vmul.f32 %v502, 1.442695
    %v504 = vpow.pop %v503
    %v505 = vadd.f32 %v504, 1.0
    %v506 = vrcp.pop %v505
    %v507 = vmul.f32 1.0, %v506
    %v508 = vadd.f32 %v325, %v457
    %v509 = vxor.u32 %v508, 2147483648
    %v510 = vmul.f32 %v509, 1.442695
    %v511 = vpow.pop %v510
    %v512 = vadd.f32 %v511, 1.0
    %v513 = vrcp.pop %v512
    %v514 = vmul.f32 1.0, %v513
    %v515 = vmul.f32 %v507, %v496
    %v516 = vadd.f32 %v364, %v515
    %v517 = vtanh.pop %v516
    %v518 = vsub.f32 1.0, %v514
    %v519 = vmul.f32 %v518, %v517
    %v520 = vmul.f32 %v514, %v199
    %v521 = vadd.f32 %v519, %v520
    %v522 = vpack.c.bf16 %v521, %v521
    %v524 = vlaneseq
    %v525 = vshrl.u32 %v524, 7
    %v526 = vsub.s32 0, %v525
    %v527 = vrot.slane %v231, %v526
    %v533 = vunpack.c.l.b16 %v227
    %v534 = vunpack.c.l.b16 %v228
    %v535 = vunpack.c.l.b16 %v229
    %v536 = vunpack.c.l.b16 %v230
    %v537 = vpack.c.b16 %v534, %v533
    %v538 = vpack.c.b16 %v536, %v535
    %v542 = vsel %vm284, %v522, 0
    %544 = vmatprep.subr.bf16.mxu0 0
    %545 = vmatpush1.bf16.msra.mxu0 0
    %546 = vmatprep.subr.bf16.mxu0 0
    %547 = vmatpush1.bf16.msra.mxu0 0
    %548 = vmatprep.subr.bf16.mxu0 0
    %549 = vmatpush1.bf16.msra.mxu0 0
    %550 = vmatprep.subr.bf16.mxu0 0
    %551 = vmatpush1.bf16.msra.mxu0 0
    %552 = vmatprep.subr.bf16.mxu0 0
    %553 = vmatpush1.bf16.msra.mxu0 0
    %554 = vmatprep.subr.bf16.mxu0 0
    %555 = vmatpush1.bf16.msra.mxu0 0
    %556 = vmatprep.subr.bf16.mxu0 0
    %557 = vmatpush1.bf16.msra.mxu0 %v538
    %558 = vmatprep.subr.bf16.mxu0 0
    %559 = vmatpush1.bf16.msra.mxu0 %v537
    %560 = vmatprep.subr.bf16.mxu0 0
    %561 = vmatpush2.bf16.msra.mxu0 0
    %562 = vmatprep.subr.bf16.mxu0 0
    %563 = vmatpush2.bf16.msra.mxu0 0
    %564 = vmatprep.subr.bf16.mxu0 0
    %565 = vmatpush2.bf16.msra.mxu0 0
    %566 = vmatprep.subr.bf16.mxu0 0
    %567 = vmatpush2.bf16.msra.mxu0 0
    %568 = vmatprep.subr.bf16.mxu0 0
    %569 = vmatpush2.bf16.msra.mxu0 0
    %570 = vmatprep.subr.bf16.mxu0 0
    %571 = vmatpush2.bf16.msra.mxu0 0
    %572 = vmatprep.subr.bf16.mxu0 0
    %573 = vmatpush2.bf16.msra.mxu0 0
    %574 = vmatprep.subr.bf16.mxu0 0
    %575 = vmatpush2.bf16.msra.mxu0 0
    %576 = vmatprep.mubr.bf16.mxu0 0
    %577 = vmatmul.mubr.bf16.gmra.mxu0 %v542
    %v578 = vpop.f32.mrf.mxu0
    %v579 = vadd.f32 %v527, %v578
    %v580 = vpop.f32.mrf.mxu0
    %v581 = vpop.f32.mrf.mxu0
    %v582 = vpop.f32.mrf.mxu0
    %583 = vdwg.mxu0
    %v586 = vunpack.c.l.s4 1966171168
    %v587 = vunpack.c.0.s8 %v586
    %v588 = vlaneseq
    %v589 = vshrl.u32 %v588, 7
    %v590 = vsub.s32 %v587, %v589
    %v591 = vrot.slane %v579, %v590
    %v592 = vcombine.high %v591, %v591
    %v594 = vunpack.c.l.s4 1966171168
    %v595 = vunpack.c.0.s8 %v594
    %v596 = vlaneseq
    %v597 = vshrl.u32 %v596, 7
    %v598 = vsub.s32 %v595, %v597
    %v599 = vrot.slane %v591, %v598
    %v601 = vunpack.c.l.s4 1966171168
    %v602 = vunpack.c.0.s8 %v601
    %v603 = vlaneseq
    %v604 = vshrl.u32 %v603, 7
    %v605 = vsub.s32 %v602, %v604
    %v606 = vrot.slane %v592, %v605
    %v607 = vcombine.high %v599, %v599
    %v608 = vcombine.high %v606, %v606
    %v609 = vlaneseq
    %v610 = vshrl.u32 %v609, 7
    %v611 = vsub.s32 0, %v610
    %v612 = vrot.slane %v599, %v611
    %v613 = vlaneseq
    %v614 = vshrl.u32 %v613, 7
    %v615 = vsub.s32 0, %v614
    %v616 = vrot.slane %v606, %v615
    %v617 = vlaneseq
    %v618 = vshrl.u32 %v617, 7
    %v619 = vsub.s32 0, %v618
    %v620 = vrot.slane %v607, %v619
    %v621 = vlaneseq
    %v622 = vshrl.u32 %v621, 7
    %v623 = vsub.s32 0, %v622
    %v624 = vrot.slane %v608, %v623
    %v629 = vadd.f32 %v204, %v612
    %v630 = vadd.f32 %v205, %v616
    %v631 = vadd.f32 %v206, %v620
    %v632 = vadd.f32 %v207, %v624
    %v633 = vtanh.pop %v629
    %v634 = vtanh.pop %v630
    %v635 = vtanh.pop %v631
    %v636 = vtanh.pop %v632
    %v638 = vlaneseq
    %v639 = vshrl.u32 %v638, 7
    %v640 = vsub.s32 0, %v639
    %v641 = vrot.slane %v232, %v640
    %v643 = vmul.f32 %v633, %v641
    %v644 = vmul.f32 %v634, %v641
    %v645 = vmul.f32 %v635, %v641
    %v646 = vmul.f32 %v636, %v641
    %v647 = vsel %vm284, %v643, 0.0
    %648 = vadd.xlane.f32.xlu0 %v647
    %v649 = vpop.xlane.xlu0 %648
    %v650 = vsel %vm284, %v644, 0.0
    %651 = vadd.xlane.f32.xlu0 %v650
    %v652 = vpop.xlane.xlu0 %651
    %v653 = vsel %vm284, %v645, 0.0
    %654 = vadd.xlane.f32.xlu0 %v653
    %v655 = vpop.xlane.xlu0 %654
    %v656 = vsel %vm284, %v646, 0.0
    %657 = vadd.xlane.f32.xlu0 %v656
    %v658 = vpop.xlane.xlu0 %657
    %v659 = vstv %s233
    %v660 = vadd.f32 %v649, %v659
    %v661 = vadd.f32 %v652, %v659
    %v662 = vadd.f32 %v655, %v659
    %v663 = vadd.f32 %v658, %v659
    %vm664 = vcmp.gt.f32.partialorder %v208, 0.5
    %v669 = vlaneseq
    %v670 = vand.u32 %v669, 127
    %v671 = vlaneseq
    %v672 = vshrl.u32 %v671, 7
    %v673 = vsub.s32 %v670, %v672
    %v674 = vrot.slane %v660, %v673
    %v675 = vlaneseq
    %v676 = vshrl.u32 %v675, 7
    %v677 = vsub.s32 %v670, %v676
    %v678 = vrot.slane %v661, %v677
    %v679 = vlaneseq
    %v680 = vshrl.u32 %v679, 7
    %v681 = vsub.s32 %v670, %v680
    %v682 = vrot.slane %v662, %v681
    %v683 = vlaneseq
    %v684 = vshrl.u32 %v683, 7
    %v685 = vsub.s32 %v670, %v684
    %v686 = vrot.slane %v663, %v685
    %vm687 = vcmask 1041409
    %v688 = vsel %vm687, %v678, %v674
    %vm689 = vcmask 1042434
    %v690 = vsel %vm689, %v682, %v688
    %vm691 = vcmask 1043459
    %v692 = vsel %vm691, %v686, %v690
    %v694 = vsel %vm664, -1e+30, %v692
    %vm695 = vcmask 60416
    %v696 = vsel %vm695, %v694, -inf
    %697 = vmax.xlane.f32.xlu0 %v696
    %v698 = vpop.xlane.xlu0 %697
    %v699 = vsub.f32 %v694, %v698
    %v700 = vmul.f32 %v699, 1.442695
    %v701 = vpow.pop %v700
    %v702 = vsel %vm695, %v701, 0.0
    %703 = vadd.xlane.f32.xlu0 %v702
    %v704 = vpop.xlane.xlu0 %703
    %v705 = vrcp.pop %v704
    %v706 = vmul.f32 %v701, %v705
    %v707 = vlaneseq
    %v708 = vshrl.u32 %v707, 7
    %v709 = vsub.s32 0, %v708
    %v710 = vrot.slane %v706, %v709
    %712 = vbcast.lane.b32.xlu0 %v710, 256
    %v713 = vpop.permute.xlu0 %712
    %v714 = vlaneseq
    %v715 = vshrl.u32 %v714, 7
    %v716 = vsub.s32 1, %v715
    %v717 = vrot.slane %v706, %v716
    %719 = vbcast.lane.b32.xlu0 %v717, 256
    %v720 = vpop.permute.xlu0 %719
    %v721 = vlaneseq
    %v722 = vshrl.u32 %v721, 7
    %v723 = vsub.s32 2, %v722
    %v724 = vrot.slane %v706, %v723
    %726 = vbcast.lane.b32.xlu0 %v724, 256
    %v727 = vpop.permute.xlu0 %726
    %v728 = vlaneseq
    %v729 = vshrl.u32 %v728, 7
    %v730 = vsub.s32 3, %v729
    %v731 = vrot.slane %v706, %v730
    %733 = vbcast.lane.b32.xlu0 %v731, 256
    %v734 = vpop.permute.xlu0 %733
    %v735 = vmul.f32 %v713, %v200
    %v736 = vmul.f32 %v720, %v201
    %v737 = vmul.f32 %v727, %v202
    %v738 = vmul.f32 %v734, %v203
    %v739 = vsel %vm284, %v735, 0.0
    %v740 = vrot.slane %v739, 4
    %v741 = vadd.f32 %v739, %v740
    %v742 = vrot.slane %v741, 2
    %v743 = vadd.f32 %v741, %v742
    %v744 = vrot.slane %v743, 1
    %v745 = vadd.f32 %v743, %v744
    %v746 = vsel %vm284, %v736, 0.0
    %v747 = vrot.slane %v746, 4
    %v748 = vadd.f32 %v746, %v747
    %v749 = vrot.slane %v748, 2
    %v750 = vadd.f32 %v748, %v749
    %v751 = vrot.slane %v750, 1
    %v752 = vadd.f32 %v750, %v751
    %v753 = vsel %vm284, %v737, 0.0
    %v754 = vrot.slane %v753, 4
    %v755 = vadd.f32 %v753, %v754
    %v756 = vrot.slane %v755, 2
    %v757 = vadd.f32 %v755, %v756
    %v758 = vrot.slane %v757, 1
    %v759 = vadd.f32 %v757, %v758
    %v760 = vsel %vm284, %v738, 0.0
    %v761 = vrot.slane %v760, 4
    %v762 = vadd.f32 %v760, %v761
    %v763 = vrot.slane %v762, 2
    %v764 = vadd.f32 %v762, %v763
    %v765 = vrot.slane %v764, 1
    %v766 = vadd.f32 %v764, %v765
    %vm767 = vcmask 257024
    %768 = vst.msk [vmem:[#allocation22] sm:$0xf] %vm767, %v521
    %v769 = vld [vmem:[#allocation18] sm:$0xf]
    %v770 = vld [vmem:[#allocation18 + $0x4] sm:$0xf]
    %v771 = vld [vmem:[#allocation18 + $0x8] sm:$0xf]
    %v772 = vld [vmem:[#allocation18 + $0xc] sm:$0xf]
    %v773 = vld [vmem:[#allocation20] sm:$0xf]
    %v774 = vld [vmem:[#allocation20 + $0x4] sm:$0xf]
    %v775 = vld [vmem:[#allocation20 + $0x8] sm:$0xf]
    %v776 = vld [vmem:[#allocation20 + $0xc] sm:$0xf]
    %v777 = vld [vmem:[%s15] sm:$0x1]
    %v778 = vpack.c.bf16 %v745, %v745
    %v779 = vpack.c.bf16 %v752, %v752
    %v780 = vpack.c.bf16 %v759, %v759
    %v781 = vpack.c.bf16 %v766, %v766
    %v786 = vunpack.c.l.b16 %v778
    %v787 = vunpack.c.l.b16 %v779
    %v788 = vunpack.c.l.b16 %v780
    %v789 = vunpack.c.l.b16 %v781
    %v790 = vsel %vm687, %v787, %v786
    %v791 = vsel %vm689, %v788, %v790
    %v792 = vsel %vm691, %v789, %v791
    %v793 = vpack.c.b16 %v792, %v792
    %v798 = vunpack.c.l.b16 %v773
    %v799 = vunpack.c.l.b16 %v774
    %v800 = vunpack.c.l.b16 %v775
    %v801 = vunpack.c.l.b16 %v776
    %v802 = vpack.c.b16 %v799, %v798
    %v803 = vpack.c.b16 %v801, %v800
    %v807 = vsel %vm284, %v793, 0
    %809 = vmatprep.subr.bf16.mxu0 0
    %810 = vmatpush1.bf16.msra.mxu0 0
    %811 = vmatprep.subr.bf16.mxu0 0
    %812 = vmatpush1.bf16.msra.mxu0 0
    %813 = vmatprep.subr.bf16.mxu0 0
    %814 = vmatpush1.bf16.msra.mxu0 0
    %815 = vmatprep.subr.bf16.mxu0 0
    %816 = vmatpush1.bf16.msra.mxu0 0
    %817 = vmatprep.subr.bf16.mxu0 0
    %818 = vmatpush1.bf16.msra.mxu0 0
    %819 = vmatprep.subr.bf16.mxu0 0
    %820 = vmatpush1.bf16.msra.mxu0 0
    %821 = vmatprep.subr.bf16.mxu0 0
    %822 = vmatpush1.bf16.msra.mxu0 %v803
    %823 = vmatprep.subr.bf16.mxu0 0
    %824 = vmatpush1.bf16.msra.mxu0 %v802
    %825 = vmatprep.subr.bf16.mxu0 0
    %826 = vmatpush2.bf16.msra.mxu0 0
    %827 = vmatprep.subr.bf16.mxu0 0
    %828 = vmatpush2.bf16.msra.mxu0 0
    %829 = vmatprep.subr.bf16.mxu0 0
    %830 = vmatpush2.bf16.msra.mxu0 0
    %831 = vmatprep.subr.bf16.mxu0 0
    %832 = vmatpush2.bf16.msra.mxu0 0
    %833 = vmatprep.subr.bf16.mxu0 0
    %834 = vmatpush2.bf16.msra.mxu0 0
    %835 = vmatprep.subr.bf16.mxu0 0
    %836 = vmatpush2.bf16.msra.mxu0 0
    %837 = vmatprep.subr.bf16.mxu0 0
    %838 = vmatpush2.bf16.msra.mxu0 0
    %839 = vmatprep.subr.bf16.mxu0 0
    %840 = vmatpush2.bf16.msra.mxu0 0
    %841 = vmatprep.mubr.bf16.mxu0 0
    %842 = vmatmul.mubr.bf16.gmra.mxu0 %v807
    %v843 = vpop.f32.mrf.mxu0
    %v844 = vadd.f32 0.0, %v843
    %v845 = vpop.f32.mrf.mxu0
    %v846 = vpop.f32.mrf.mxu0
    %v847 = vpop.f32.mrf.mxu0
    %848 = vdwg.mxu0
    %v853 = vunpack.c.l.b16 %v769
    %v854 = vunpack.c.l.b16 %v770
    %v855 = vunpack.c.l.b16 %v771
    %v856 = vunpack.c.l.b16 %v772
    %v857 = vpack.c.b16 %v854, %v853
    %v858 = vpack.c.b16 %v856, %v855
    %861 = vmatprep.subr.bf16.mxu0 0
    %862 = vmatpush1.bf16.msra.mxu0 0
    %863 = vmatprep.subr.bf16.mxu0 0
    %864 = vmatpush1.bf16.msra.mxu0 0
    %865 = vmatprep.subr.bf16.mxu0 0
    %866 = vmatpush1.bf16.msra.mxu0 0
    %867 = vmatprep.subr.bf16.mxu0 0
    %868 = vmatpush1.bf16.msra.mxu0 0
    %869 = vmatprep.subr.bf16.mxu0 0
    %870 = vmatpush1.bf16.msra.mxu0 0
    %871 = vmatprep.subr.bf16.mxu0 0
    %872 = vmatpush1.bf16.msra.mxu0 0
    %873 = vmatprep.subr.bf16.mxu0 0
    %874 = vmatpush1.bf16.msra.mxu0 %v858
    %875 = vmatprep.subr.bf16.mxu0 0
    %876 = vmatpush1.bf16.msra.mxu0 %v857
    %877 = vmatprep.subr.bf16.mxu0 0
    %878 = vmatpush2.bf16.msra.mxu0 0
    %879 = vmatprep.subr.bf16.mxu0 0
    %880 = vmatpush2.bf16.msra.mxu0 0
    %881 = vmatprep.subr.bf16.mxu0 0
    %882 = vmatpush2.bf16.msra.mxu0 0
    %883 = vmatprep.subr.bf16.mxu0 0
    %884 = vmatpush2.bf16.msra.mxu0 0
    %885 = vmatprep.subr.bf16.mxu0 0
    %886 = vmatpush2.bf16.msra.mxu0 0
    %887 = vmatprep.subr.bf16.mxu0 0
    %888 = vmatpush2.bf16.msra.mxu0 0
    %889 = vmatprep.subr.bf16.mxu0 0
    %890 = vmatpush2.bf16.msra.mxu0 0
    %891 = vmatprep.subr.bf16.mxu0 0
    %892 = vmatpush2.bf16.msra.mxu0 0
    %893 = vmatprep.mubr.bf16.mxu0 0
    %894 = vmatmul.mubr.bf16.gmra.mxu0 %v542
    %v895 = vpop.f32.mrf.mxu0
    %v896 = vadd.f32 %v844, %v895
    %v897 = vpop.f32.mrf.mxu0
    %v898 = vpop.f32.mrf.mxu0
    %v899 = vpop.f32.mrf.mxu0
    %900 = vdwg.mxu0
    %v902 = vlaneseq
    %v903 = vshrl.u32 %v902, 7
    %v904 = vsub.s32 0, %v903
    %v905 = vrot.slane %v777, %v904
    %v907 = vadd.f32 %v896, %v905
    %908 = vst [vmem:[#allocation21] sm:$0xf] %v907
    // Predicated region
    $region110: #{tpu_custom_call.1} parent=1 // pred_check
      _
    $region111: #{tpu_custom_call.1} parent=1 // pred_check_branch
      %910 = sbr.rel (0) target = $region113
    $region112: #{tpu_custom_call.1} parent=1 // pred_region
      %s912 = ssub.s32 64, 64
      %913 = vsyncadd [#allocation5], %s912
      %s915 = sshll.u32 [#allocation21], 4
      %s916 = int_to_ptr.vmem [resolvable:$true] %s915
      %918 = dma.vmem_to_hbm [thread:$0]  %s916, 64, %s16, [#allocation5]
    $region113: #{tpu_custom_call.1} parent=1 // pred_fallthru
      _
    // Predicated region
    $region114: #{tpu_custom_call.1} parent=1 // pred_check
      _
    $region115: #{tpu_custom_call.1} parent=1 // pred_check_branch
      %920 = sbr.rel (0) target = $region117
    $region116: #{tpu_custom_call.1} parent=1 // pred_region
      %s922 = ssub.s32 64, 64
      %923 = vsyncadd [#allocation23], %s922
      %s925 = sshll.u32 [#allocation22], 4
      %s926 = int_to_ptr.vmem [resolvable:$true] %s925
      %928 = dma.vmem_to_hbm [thread:$0]  %s926, 64, %s17, [#allocation23]
    $region117: #{tpu_custom_call.1} parent=1 // pred_fallthru
      _
    // Predicated region
    $region118: #{tpu_custom_call.1} parent=1 // pred_check
      _
    $region119: #{tpu_custom_call.1} parent=1 // pred_check_branch
      %930 = sbr.rel (0) target = $region121
    $region120: #{tpu_custom_call.1} parent=1 // pred_region
      %931 = dma.done [#allocation5], 64
    $region121: #{tpu_custom_call.1} parent=1 // pred_fallthru
      _
    // Predicated region
    $region122: #{tpu_custom_call.1} parent=1 // pred_check
      _
    $region123: #{tpu_custom_call.1} parent=1 // pred_check_branch
      %933 = sbr.rel (0) target = $region125
    $region124: #{tpu_custom_call.1} parent=1 // pred_region
      %934 = dma.done [#allocation23], 64
    $region125: #{tpu_custom_call.1} parent=1 // pred_fallthru
      _
    %935 = vsyncpa [#allocation4], 1
    %936 = vsyncpa [#allocation7], 1
    %937 = vsyncpa [#allocation10], 1
    %938 = vsyncpa [#allocation13], 1
    %939 = vsyncpa [#allocation16], 1
    %940 = vsyncpa [#allocation19], 1
    %941 = vsyncpa [#allocation5], 1
    %942 = vsyncpa [#allocation23], 1

</llo_original>
